<compile_context>
chip_gen: v6e
topology: v6e:2x2x1
jax: 0.10.0
libtpu: 0.0.40
codegen_flags: <defaults>
</compile_context>

<pallas_src>
import jax
import jax.numpy as jnp
from jax.experimental import pallas as pl
from jax.experimental.pallas import tpu as pltpu


# --------------------------------------------------------------------------
# Helpers
# --------------------------------------------------------------------------
def _round_up(x: int, m: int) -> int:
    return ((x + m - 1) // m) * m


def _sublane_min(dtype) -> int:
    # Minimum second-to-last tile dim: 8 for 4-byte, 16 for 2-byte, 32 for 1-byte.
    return max(8, 32 // jnp.dtype(dtype).itemsize)


def _vmem_budget_bytes() -> int:
    """Per-generation VMEM budget: ~half of physical, capped at 64 MiB.

    v5e/v6e (128 MiB physical) -> 64 MiB; v7x (64 MiB per TC) -> 32 MiB.
    Falls back to the v7x-safe 32 MiB if the query is unavailable.
    """
    try:
        info = pltpu.get_tpu_info()
        phys = getattr(info, "vmem_capacity_bytes", None)
        if phys:
            return int(min(phys // 2, 64 * 1024 * 1024))
    except Exception:
        pass
    return 32 * 1024 * 1024


def _pick_tile(dim: int, cap: int, unit: int):
    """Pick a tile size (multiple of `unit`) for `dim` (itself a multiple of
    `unit`), preferring exact divisors (zero pad waste); otherwise allow a
    bigger tile with <= 1/8 pad waste. Returns (tile, padded_dim)."""
    cap = max(unit, (min(cap, dim) // unit) * unit)
    best = unit
    for t in range(cap, unit - 1, -unit):
        if dim % t == 0:
            best = t
            break
    if best >= min(cap, 128):
        return best, dim
    for t in range(cap, best, -unit):
        padded = -(-dim // t) * t
        if (padded - dim) * 8 <= dim:      # <= 12.5% pad waste
            return t, padded
    return best, dim


# --------------------------------------------------------------------------
# Kernels
# --------------------------------------------------------------------------
def _linear_kernel_single_k(x_ref, w_ref, b_ref, o_ref):
    # One (tm, tn) output tile; the whole K reduction is resident in VMEM, so
    # there is no accumulator, no pl.when, and bias is fused into the store.
    o_ref[...] = (jnp.dot(x_ref[...], w_ref[...],
                          preferred_element_type=jnp.float32)
                  + b_ref[...]).astype(o_ref.dtype)


def _linear_kernel_tiled_k_f32(x_ref, w_ref, b_ref, o_ref):
    # f32 output: accumulate directly into the resident output block (its
    # BlockSpec index is k-invariant) -- no VMEM scratch, no epilogue copy.
    @pl.when(pl.program_id(2) == 0)
    def _init():
        o_ref[...] = jnp.broadcast_to(b_ref[...], o_ref.shape)

    o_ref[...] += jnp.dot(x_ref[...], w_ref[...],
                          preferred_element_type=jnp.float32)


def _linear_kernel_tiled_k_acc(x_ref, w_ref, b_ref, o_ref, acc_ref):
    # Narrow output dtypes: keep an f32 scratch accumulator.
    k = pl.program_id(2)

    @pl.when(k == 0)
    def _init():
        acc_ref[...] = jnp.zeros_like(acc_ref)

    acc_ref[...] += jnp.dot(x_ref[...], w_ref[...],
                            preferred_element_type=jnp.float32)

    @pl.when(k == pl.num_programs(2) - 1)
    def _finalize():
        o_ref[...] = (acc_ref[...] + b_ref[...]).astype(o_ref.dtype)


# --------------------------------------------------------------------------
# Wrapper
# --------------------------------------------------------------------------
def prepare_linear_params(weight, bias):
    """One-time parameter layout prep (hoisted out of the per-call path).

    weight: (D_out, D_in) PyTorch Linear convention.
    Returns (w_p, b_p): weight pre-transposed to (D_in, D_out) and zero-padded
    to 128-lane multiples; bias as a (1, Np) f32 row.
    """
    d_out, d_in = weight.shape
    kp, np_ = _round_up(d_in, 128), _round_up(d_out, 128)
    w_t = jnp.transpose(weight)                                   # (D_in, D_out)
    if (kp, np_) != (d_in, d_out):
        w_t = jnp.pad(w_t, ((0, kp - d_in), (0, np_ - d_out)))
    b = bias.astype(jnp.float32).reshape(1, d_out)
    if np_ != d_out:
        b = jnp.pad(b, ((0, 0), (0, np_ - d_out)))
    return w_t, b


def linear_forward_prepared(x, w_p, b_p, d_out, *, tm=512, tn=256, tk=512,
                            force_pallas=False):
    """y = x @ W^T + b using the pre-prepared (transposed/padded) params."""
    B, d_in = x.shape
    out_dtype = x.dtype
    assert w_p.shape[0] == _round_up(d_in, 128)

    # Fast path: at tiny batch the MXU is <10% row-utilized and pallas_call
    # fixed overhead dominates -- XLA's fused GEMM is strictly faster.
    if not force_pallas and B <= 128:
        y = jnp.dot(x, w_p[:d_in, :d_out], preferred_element_type=jnp.float32)
        return (y + b_p[0, :d_out]).astype(out_dtype)

    sub_min = _sublane_min(x.dtype)
    Mp = _round_up(B, sub_min)            # dtype-minimum sublane padding only
    Kp, Np = w_p.shape                    # already 128-aligned

    budget = _vmem_budget_bytes()
    x_bytes = jnp.dtype(x.dtype).itemsize
    w_bytes = jnp.dtype(w_p.dtype).itemsize
    o_bytes = jnp.dtype(out_dtype).itemsize

    # ---- tile selection -------------------------------------------------
    tn_, Np_pad = _pick_tile(Np, tn, 128)
    n_tiles = Np_pad // tn_

    tm_cap = tm
    if n_tiles == 1 and Mp >= 512:
        # N grid is 1-wide: guarantee >= 2 M tiles so both TensorCores get work.
        tm_cap = min(tm_cap, Mp // 2)
    tm_, Mp_pad = _pick_tile(Mp, tm_cap, sub_min)

    def footprint(tm_b, tk_b, tn_b, acc):
        f = 2 * tm_b * tk_b * x_bytes          # double-buffered x tile
        f += 2 * tk_b * tn_b * w_bytes         # double-buffered w tile
        f += 2 * tn_b * 4                      # bias
        f += 2 * tm_b * tn_b * o_bytes         # output tile
        if acc:
            f += tm_b * tn_b * 4               # f32 accumulator scratch
        return f

    if footprint(tm_, Kp, tn_, acc=False) <= budget:
        # Collapse the K grid: the whole reduction fits in VMEM.
        tk_, Kp_pad, tiled_k = Kp, Kp, False
    else:
        tiled_k = True
        acc_needed = out_dtype != jnp.float32
        tk_cap = tk
        tk_, Kp_pad = _pick_tile(Kp, tk_cap, 128)
        while footprint(tm_, tk_, tn_, acc_needed) > budget and tk_cap > 128:
            tk_cap = max(128, tk_cap // 2)
            tk_, Kp_pad = _pick_tile(Kp, tk_cap, 128)

    # ---- minimal zero-padding (exactness preserved; padded rows/cols of the
    # output are sliced off; zero K columns contribute nothing) --------------
    x_p = x
    if Mp_pad != B or Kp_pad != d_in:
        x_p = jnp.pad(x, ((0, Mp_pad - B), (0, Kp_pad - d_in)))
    w_run, b_run = w_p, b_p
    if Kp_pad != Kp or Np_pad != Np:       # rare: tile didn't divide 128-aligned dims
        w_run = jnp.pad(w_p, ((0, Kp_pad - Kp), (0, Np_pad - Np)))
    if Np_pad != Np:
        b_run = jnp.pad(b_p, ((0, 0), (0, Np_pad - Np)))

    # ---- pallas_call ------------------------------------------------------
    # TODO(synk): if DMA is still exposed on very skinny-N problems, consider
    # pipeline_mode=pl.Buffered(3) on the x BlockSpec (check v7x VMEM budget).
    if not tiled_k:
        grid = (Mp_pad // tm_, n_tiles)
        out = pl.pallas_call(
            _linear_kernel_single_k,
            out_shape=jax.ShapeDtypeStruct((Mp_pad, Np_pad), out_dtype),
            grid_spec=pltpu.PrefetchScalarGridSpec(
                num_scalar_prefetch=0,
                grid=grid,
                in_specs=[
                    pl.BlockSpec((tm_, Kp_pad), lambda i, j: (i, 0)),   # x
                    pl.BlockSpec((Kp_pad, tn_), lambda i, j: (0, j)),   # W^T
                    pl.BlockSpec((1, tn_), lambda i, j: (0, j)),        # bias
                ],
                out_specs=pl.BlockSpec((tm_, tn_), lambda i, j: (i, j)),
            ),
            compiler_params=pltpu.CompilerParams(
                dimension_semantics=("parallel", "parallel"),
                vmem_limit_bytes=budget,
            ),
        )(x_p, w_run, b_run)
    else:
        grid = (Mp_pad // tm_, n_tiles, Kp_pad // tk_)
        if out_dtype == jnp.float32:
            kernel, scratch = _linear_kernel_tiled_k_f32, []
        else:
            kernel = _linear_kernel_tiled_k_acc
            scratch = [pltpu.VMEM((tm_, tn_), jnp.float32)]
        out = pl.pallas_call(
            kernel,
            out_shape=jax.ShapeDtypeStruct((Mp_pad, Np_pad), out_dtype),
            grid_spec=pltpu.PrefetchScalarGridSpec(
                num_scalar_prefetch=0,
                grid=grid,
                in_specs=[
                    pl.BlockSpec((tm_, tk_), lambda i, j, k: (i, k)),   # x
                    pl.BlockSpec((tk_, tn_), lambda i, j, k: (k, j)),   # W^T
                    pl.BlockSpec((1, tn_), lambda i, j, k: (0, j)),     # bias
                ],
                out_specs=pl.BlockSpec((tm_, tn_), lambda i, j, k: (i, j)),
                scratch_shapes=scratch,
            ),
            compiler_params=pltpu.CompilerParams(
                dimension_semantics=("parallel", "parallel", "arbitrary"),
                vmem_limit_bytes=budget,
            ),
        )(x_p, w_run, b_run)

    if Mp_pad != B or Np_pad != d_out:
        out = out[:B, :d_out]
    return out


def logistic_regression_forward(x, weight, bias, **kwargs):
    """Convenience wrapper matching torch.nn.Linear forward.

    NOTE: in real use call prepare_linear_params() once per model and reuse
    the prepared params across forward calls (the transpose/pad is per-param,
    not per-forward).
    """
    w_p, b_p = prepare_linear_params(weight, bias)
    return linear_forward_prepared(x, w_p, b_p, weight.shape[0], **kwargs)


# --------------------------------------------------------------------------
# Demo / self-test
# --------------------------------------------------------------------------
if __name__ == "__main__":
    def make_problem(key, batch, d_in, d_out):
        kx, kw, kb = jax.random.split(key, 3)
        x = jax.random.normal(kx, (batch, d_in), dtype=jnp.float32)
        # torch.nn.Linear init: U(-1/sqrt(in), 1/sqrt(in)).
        bound = 1.0 / jnp.sqrt(jnp.float32(d_in))
        w = jax.random.uniform(kw, (d_out, d_in), jnp.float32, -bound, bound)
        b = jax.random.uniform(kb, (d_out,), jnp.float32, -bound, bound)
        return x, w, b

    key = jax.random.PRNGKey(0)
    k1, k2 = jax.random.split(key)

    # 1) Tiny shapes implied by the module (batch=8, input_dim=32, output_dim=16).
    #    Dispatcher takes the XLA fast path at this size.
    x, w, b = make_problem(k1, 8, 32, 16)
    ref = x @ w.T + b
    out = jax.block_until_ready(logistic_regression_forward(x, w, b))
    assert out.shape == ref.shape
    assert jnp.allclose(out, ref, atol=1e-5, rtol=1e-5)

    #    Same tiny shapes forced through the Pallas path (single lane-dense
    #    tile, collapsed K grid) to validate the kernel itself.
    out_p = jax.block_until_ready(
        logistic_regression_forward(x, w, b, force_pallas=True))
    assert jnp.allclose(out_p, ref, atol=1e-5, rtol=1e-5)

    # 2) A larger (still small) problem exercising the real Pallas path:
    #    multi-tile M grid (3 x 200-row tiles, zero M padding), minimal
    #    lane-only K padding (300 -> 384), collapsed K, output slice 128 -> 20.
    x, w, b = make_problem(k2, 600, 300, 20)
    ref = x @ w.T + b
    out = jax.block_until_ready(logistic_regression_forward(x, w, b))
    assert out.shape == ref.shape
    assert jnp.allclose(out, ref, atol=1e-4, rtol=1e-5)

    print("KERNEL_OK")
</pallas_src>

<mosaic_0001>
module attributes {stable_mosaic.version = 11 : i64} {
  func.func @_linear_kernel_single_k(%arg0: i32, %arg1: i32, %arg2: memref<8x128xf32, #tpu.memory_space<vmem>>, %arg3: memref<128x128xf32, #tpu.memory_space<vmem>>, %arg4: memref<1x128xf32, #tpu.memory_space<vmem>>, %arg5: memref<8x128xf32, #tpu.memory_space<vmem>>) attributes {dimension_semantics = [#tpu.dimension_semantics<parallel>, #tpu.dimension_semantics<parallel>], iteration_bounds = array<i64: 1, 1>, scalar_prefetch = 0 : i64, scratch_operands = 0 : i64, tpu.core_type = #tpu.core_type<tc>, window_params = [{transform_indices = @transform_0, window_bounds = array<i64: 8, 128>}, {transform_indices = @transform_1, window_bounds = array<i64: 128, 128>}, {transform_indices = @transform_2, window_bounds = array<i64: 1, 128>}, {transform_indices = @transform_3, window_bounds = array<i64: 8, 128>}]} {
    %c0 = arith.constant 0 : index
    %c0_0 = arith.constant 0 : index
    %0 = vector.load %arg2[%c0, %c0_0] : memref<8x128xf32, #tpu.memory_space<vmem>>, vector<8x128xf32>
    %c0_1 = arith.constant 0 : index
    %c0_2 = arith.constant 0 : index
    %1 = vector.load %arg3[%c0_1, %c0_2] : memref<128x128xf32, #tpu.memory_space<vmem>>, vector<128x128xf32>
    %cst = arith.constant dense<0.000000e+00> : vector<8x128xf32>
    %2 = tpu.matmul %0, %1, %cst {dimension_numbers = #tpu.dot_dimension_numbers<[1], [0], [0], [1], [0, 0, 1, 1], [], []>} : vector<8x128xf32>, vector<128x128xf32>, vector<8x128xf32> -> vector<8x128xf32>
    %c0_3 = arith.constant 0 : index
    %c0_4 = arith.constant 0 : index
    %3 = vector.load %arg4[%c0_3, %c0_4] : memref<1x128xf32, #tpu.memory_space<vmem>>, vector<1x128xf32>
    %4 = vector.broadcast %3 : vector<1x128xf32> to vector<8x128xf32>
    %5 = arith.addf %2, %4 : vector<8x128xf32>
    %c0_5 = arith.constant 0 : index
    %c0_6 = arith.constant 0 : index
    %6 = vector.load %arg5[%c0_5, %c0_6] : memref<8x128xf32, #tpu.memory_space<vmem>>, vector<8x128xf32>
    tpu.vector_store %arg5[%c0_5, %c0_6], %5 {strides = array<i32>} : memref<8x128xf32, #tpu.memory_space<vmem>>, vector<8x128xf32>,
    return
  }
  func.func @transform_0(%arg0: i32, %arg1: i32) -> (i32, i32) {
    %c0_i32 = arith.constant 0 : i32
    %c0_i32_0 = arith.constant 0 : i32
    return %arg0, %c0_i32 : i32, i32
  }
  func.func @transform_1(%arg0: i32, %arg1: i32) -> (i32, i32) {
    %c0_i32 = arith.constant 0 : i32
    %c0_i32_0 = arith.constant 0 : i32
    return %c0_i32, %arg1 : i32, i32
  }
  func.func @transform_2(%arg0: i32, %arg1: i32) -> (i32, i32) {
    %c0_i32 = arith.constant 0 : i32
    %c0_i32_0 = arith.constant 0 : i32
    return %c0_i32, %arg1 : i32, i32
  }
  func.func @transform_3(%arg0: i32, %arg1: i32) -> (i32, i32) {
    %c0_i32 = arith.constant 0 : i32
    return %arg0, %arg1 : i32, i32
  }
}

</mosaic_0001>

<llo_original>
// kernel: tpu_custom_call.1
$region0: #{tpu_custom_call.1}
  #allocation0 [shape = 'u32[]', space=smem, size = 0x4, offset = 0x4, fixed_abs, tag = 'smem constant byte address 0x4 - core index']
  #allocation1 [shape = 'u32[144,128]{1,0:T(1,128)}', space=vmem, size = 0x12000, scoped, tag = 'internal scratch']
  %s0 = inlined_call_operand.hbm [shape: f32[8,128], index: 0, kind: input, shape index: {}]
  %s1 = inlined_call_operand.hbm [shape: f32[128,128], index: 1, kind: input, shape index: {}]
  %s2 = inlined_call_operand.vmem [shape: f32[1,128], index: 2, kind: input, shape index: {}]
  %s3 = inlined_call_operand.hbm [shape: f32[8,128], index: 3, kind: output, shape index: {}]
  %s4 = sld [smem:[#allocation0]]
  $region30: #{tpu_custom_call.1} parent=0
    _
  %s6 = ssub.s32 1, %s4
  %s7 = scalar_select 0, %s6, %s4
  $region1: #{tpu_custom_call.1} parent=0
    #allocation2 [shape = 'u8[4096]{0}', space=vmem, size = 0x1000, scoped, tag = 'input window, operand 0, single buffered']
    #allocation3 [shape = 's32[1]{0}', space=sflag, size = 0x4, scoped, tag = 'scoped memory for tpu_custom_call.1']
    #allocation4 [shape = 's32[1]{0}', space=sflag, size = 0x4, scoped, tag = 'scoped memory for tpu_custom_call.1']
    #allocation5 [shape = 'u8[65536]{0}', space=vmem, size = 0x10000, scoped, tag = 'input window, operand 1, single buffered']
    #allocation6 [shape = 's32[1]{0}', space=sflag, size = 0x4, scoped, tag = 'scoped memory for tpu_custom_call.1']
    #allocation7 [shape = 'u8[4096]{0}', space=vmem, size = 0x1000, scoped, tag = 'output window, operand 0, single buffered']
    %8 = vsyncpa [#allocation3], 0
    %9 = vsyncpa [#allocation6], 0
    %10 = vsyncpa [#allocation4], 0
    // Predicated region
    $region2: #{tpu_custom_call.1} parent=1 // pred_check
      _
    $region3: #{tpu_custom_call.1} parent=1 // pred_check_branch
      %12 = sbr.rel (0) target = $region5
    $region4: #{tpu_custom_call.1} parent=1 // pred_region
      %s14 = ssub.s32 128, 128
      %15 = vsyncadd [#allocation3], %s14
      %s17 = sshll.u32 [#allocation2], 4
      %s18 = int_to_ptr.vmem [resolvable:$true] %s17
      %20 = dma.hbm_to_vmem [thread:$0]  %s0, 128, %s18, [#allocation3]
    $region5: #{tpu_custom_call.1} parent=1 // pred_fallthru
      _
    // Predicated region
    $region6: #{tpu_custom_call.1} parent=1 // pred_check
      _
    $region7: #{tpu_custom_call.1} parent=1 // pred_check_branch
      %22 = sbr.rel (0) target = $region9
    $region8: #{tpu_custom_call.1} parent=1 // pred_region
      %s24 = ssub.s32 2048, 2048
      %25 = vsyncadd [#allocation6], %s24
      %s26 = sshll.u32 [#allocation5], 4
      %s27 = int_to_ptr.vmem [resolvable:$true] %s26
      %32 = dma.hbm_to_vmem [thread:$0]  %s1, 2048, %s27, [#allocation6], 128, 128, 8
    $region9: #{tpu_custom_call.1} parent=1 // pred_fallthru
      _
    // Predicated region
    $region10: #{tpu_custom_call.1} parent=1 // pred_check
      _
    $region11: #{tpu_custom_call.1} parent=1 // pred_check_branch
      %34 = sbr.rel (0) target = $region13
    $region12: #{tpu_custom_call.1} parent=1 // pred_region
      _
    $region13: #{tpu_custom_call.1} parent=1 // pred_fallthru
      _
    // Predicated region
    $region14: #{tpu_custom_call.1} parent=1 // pred_check
      _
    $region15: #{tpu_custom_call.1} parent=1 // pred_check_branch
      %36 = sbr.rel (0) target = $region17
    $region16: #{tpu_custom_call.1} parent=1 // pred_region
      %37 = dma.done [#allocation3], 128
    $region17: #{tpu_custom_call.1} parent=1 // pred_fallthru
      _
    // Predicated region
    $region18: #{tpu_custom_call.1} parent=1 // pred_check
      _
    $region19: #{tpu_custom_call.1} parent=1 // pred_check_branch
      %39 = sbr.rel (0) target = $region21
    $region20: #{tpu_custom_call.1} parent=1 // pred_region
      %40 = dma.done [#allocation6], 2048
    $region21: #{tpu_custom_call.1} parent=1 // pred_fallthru
      _
    %v41 = vld [vmem:[#allocation2] sm:$0xff]
    %v42 = vld [vmem:[#allocation5] sm:$0xff]
    %v43 = vld [vmem:[#allocation5 + $0x8] sm:$0xff]
    %v44 = vld [vmem:[#allocation5 + $0x10] sm:$0xff]
    %v45 = vld [vmem:[#allocation5 + $0x18] sm:$0xff]
    %v46 = vld [vmem:[#allocation5 + $0x20] sm:$0xff]
    %v47 = vld [vmem:[#allocation5 + $0x28] sm:$0xff]
    %v48 = vld [vmem:[#allocation5 + $0x30] sm:$0xff]
    %v49 = vld [vmem:[#allocation5 + $0x38] sm:$0xff]
    %v50 = vld [vmem:[#allocation5 + $0x40] sm:$0xff]
    %v51 = vld [vmem:[#allocation5 + $0x48] sm:$0xff]
    %v52 = vld [vmem:[#allocation5 + $0x50] sm:$0xff]
    %v53 = vld [vmem:[#allocation5 + $0x58] sm:$0xff]
    %v54 = vld [vmem:[#allocation5 + $0x60] sm:$0xff]
    %v55 = vld [vmem:[#allocation5 + $0x68] sm:$0xff]
    %v56 = vld [vmem:[#allocation5 + $0x70] sm:$0xff]
    %v57 = vld [vmem:[#allocation5 + $0x78] sm:$0xff]
    %v58 = vld [vmem:[%s2] sm:$0x1]
    %v60 = vlaneseq
    %v61 = vshrl.u32 %v60, 7
    %v62 = vsub.s32 0, %v61
    %v63 = vrot.slane %v58, %v62
    %65 = vmatprep.subr.mxu0 0.0
    %66 = vmatpush1.msra.mxu0 %v57
    %67 = vmatprep.subr.mxu0 0.0
    %68 = vmatpush1.msra.mxu0 %v56
    %69 = vmatprep.subr.mxu0 0.0
    %70 = vmatpush1.msra.mxu0 %v55
    %71 = vmatprep.subr.mxu0 0.0
    %72 = vmatpush1.msra.mxu0 %v54
    %73 = vmatprep.subr.mxu0 0.0
    %74 = vmatpush1.msra.mxu0 %v53
    %75 = vmatprep.subr.mxu0 0.0
    %76 = vmatpush1.msra.mxu0 %v52
    %77 = vmatprep.subr.mxu0 0.0
    %78 = vmatpush1.msra.mxu0 %v51
    %79 = vmatprep.subr.mxu0 0.0
    %80 = vmatpush1.msra.mxu0 %v50
    %81 = vmatprep.subr.mxu0 0.0
    %82 = vmatpush1.msra.mxu0 %v49
    %83 = vmatprep.subr.mxu0 0.0
    %84 = vmatpush1.msra.mxu0 %v48
    %85 = vmatprep.subr.mxu0 0.0
    %86 = vmatpush1.msra.mxu0 %v47
    %87 = vmatprep.subr.mxu0 0.0
    %88 = vmatpush1.msra.mxu0 %v46
    %89 = vmatprep.subr.mxu0 0.0
    %90 = vmatpush1.msra.mxu0 %v45
    %91 = vmatprep.subr.mxu0 0.0
    %92 = vmatpush1.msra.mxu0 %v44
    %93 = vmatprep.subr.mxu0 0.0
    %94 = vmatpush1.msra.mxu0 %v43
    %95 = vmatprep.subr.mxu0 0.0
    %96 = vmatpush1.msra.mxu0 %v42
    %97 = vmatprep.subr.mxu0 0.0
    %98 = vmatpush2.msra.mxu0 0.0
    %99 = vmatprep.subr.mxu0 0.0
    %100 = vmatpush2.msra.mxu0 0.0
    %101 = vmatprep.subr.mxu0 0.0
    %102 = vmatpush2.msra.mxu0 0.0
    %103 = vmatprep.subr.mxu0 0.0
    %104 = vmatpush2.msra.mxu0 0.0
    %105 = vmatprep.subr.mxu0 0.0
    %106 = vmatpush2.msra.mxu0 0.0
    %107 = vmatprep.subr.mxu0 0.0
    %108 = vmatpush2.msra.mxu0 0.0
    %109 = vmatprep.subr.mxu0 0.0
    %110 = vmatpush2.msra.mxu0 0.0
    %111 = vmatprep.subr.mxu0 0.0
    %112 = vmatpush2.msra.mxu0 0.0
    %113 = vmatprep.subr.mxu0 0.0
    %114 = vmatpush2.msra.mxu0 0.0
    %115 = vmatprep.subr.mxu0 0.0
    %116 = vmatpush2.msra.mxu0 0.0
    %117 = vmatprep.subr.mxu0 0.0
    %118 = vmatpush2.msra.mxu0 0.0
    %119 = vmatprep.subr.mxu0 0.0
    %120 = vmatpush2.msra.mxu0 0.0
    %121 = vmatprep.subr.mxu0 0.0
    %122 = vmatpush2.msra.mxu0 0.0
    %123 = vmatprep.subr.mxu0 0.0
    %124 = vmatpush2.msra.mxu0 0.0
    %125 = vmatprep.subr.mxu0 0.0
    %126 = vmatpush2.msra.mxu0 0.0
    %127 = vmatprep.subr.mxu0 0.0
    %128 = vmatpush2.msra.mxu0 0.0
    %129 = vmatprep.mubr.f32.mxu0 0.0
    %130 = vmatmul.mubr.f32.gmra.mxu0 %v41
    %v131 = vpop.f32.mrf.mxu0
    %v132 = vadd.f32 %v63, %v131
    %v133 = vpop.f32.mrf.mxu0
    %134 = vdwg.mxu0
    %135 = vst [vmem:[#allocation7] sm:$0xff] %v132
    // Predicated region
    $region22: #{tpu_custom_call.1} parent=1 // pred_check
      _
    $region23: #{tpu_custom_call.1} parent=1 // pred_check_branch
      %137 = sbr.rel (0) target = $region25
    $region24: #{tpu_custom_call.1} parent=1 // pred_region
      %s139 = ssub.s32 128, 128
      %140 = vsyncadd [#allocation4], %s139
      %s142 = sshll.u32 [#allocation7], 4
      %s143 = int_to_ptr.vmem [resolvable:$true] %s142
      %145 = dma.vmem_to_hbm [thread:$0]  %s143, 128, %s3, [#allocation4]
    $region25: #{tpu_custom_call.1} parent=1 // pred_fallthru
      _
    // Predicated region
    $region26: #{tpu_custom_call.1} parent=1 // pred_check
      _
    $region27: #{tpu_custom_call.1} parent=1 // pred_check_branch
      %147 = sbr.rel (0) target = $region29
    $region28: #{tpu_custom_call.1} parent=1 // pred_region
      %148 = dma.done [#allocation4], 128
    $region29: #{tpu_custom_call.1} parent=1 // pred_fallthru
      _
    %149 = vsyncpa [#allocation3], 1
    %150 = vsyncpa [#allocation6], 1
    %151 = vsyncpa [#allocation4], 1

</llo_original>
